<compile_context>
chip_gen: v7x
topology: tpu7x:2x2x1
jax: 0.10.0
libtpu: 0.0.40
codegen_flags: <defaults>
</compile_context>

<pallas_src>
import jax
import jax.numpy as jnp
from jax.experimental import pallas as pl
from jax.experimental.pallas import tpu as pltpu

LANE = 128
_MAX_BLOCK_BYTES = 2 * 1024 * 1024   # ~2 MiB/block -> <=8 MiB over 4 pipeline buffers
_MAX_N_UNROLL = 16                   # cap static unroll of the folded-N loop
_MIN_GRID_STEPS = 8                  # keep v7x's 2 TCs + the DMA pipeline busy


def _cdiv(a, b):
    return -(-a // b)


# ----------------------------------------------------------------------------
# SE(3) exponential map (pytorch3d.transforms.se3_exp_map convention) — plain JAX.
# ----------------------------------------------------------------------------
def _hat(w):
    x, y, z = w[:, 0], w[:, 1], w[:, 2]
    zero = jnp.zeros_like(x)
    return jnp.stack(
        [
            jnp.stack([zero, -z, y], axis=-1),
            jnp.stack([z, zero, -x], axis=-1),
            jnp.stack([-y, x, zero], axis=-1),
        ],
        axis=-2,
    )


def se3_exp_map(log_transform, eps=1e-4):
    """log_transform: (N, 6) = [log_translation | log_rotation] -> (N, 4, 4),
    row-vector convention (R in [:3,:3], translation in row 3)."""
    v = log_transform[:, :3]
    w = log_transform[:, 3:]
    n = log_transform.shape[0]
    nrms = jnp.sum(w * w, axis=1)
    theta = jnp.sqrt(jnp.clip(nrms, eps))
    K = _hat(w)
    K2 = jnp.matmul(K, K)
    sin_t = jnp.sin(theta)
    cos_t = jnp.cos(theta)
    fac1 = (sin_t / theta)[:, None, None]
    fac2 = ((1.0 - cos_t) / (theta**2))[:, None, None]
    fac3 = ((theta - sin_t) / (theta**3))[:, None, None]
    eye = jnp.eye(3, dtype=log_transform.dtype)[None]
    R = eye + fac1 * K + fac2 * K2
    V = eye + fac2 * K + fac3 * K2
    t = jnp.matmul(V, v[:, :, None])[:, :, 0]
    T = jnp.zeros((n, 4, 4), dtype=log_transform.dtype)
    T = T.at[:, :3, :3].set(R)
    T = T.at[:, 3, :3].set(t)
    T = T.at[:, 3, 3].set(1.0)
    return T


def se3_to_matrix(G):
    B, N, _ = G.shape
    return jnp.swapaxes(se3_exp_map(G.reshape(-1, 6)), -2, -1).reshape(B, N, 4, 4)


def se3_to_matrix_inv(G):
    T = se3_to_matrix(G)
    Rt = jnp.swapaxes(T[:, :, :3, :3], -2, -1)
    trans = T[:, :, :3, 3:]
    T = T.at[:, :, :3, :3].set(Rt)
    T = T.at[:, :, :3, 3:].set(-jnp.matmul(Rt, trans))
    return T


# ----------------------------------------------------------------------------
# Pallas kernel: out[b,n,c,:] = sum_k T[b,n,c,k] * P[b,n,k,:]
# ----------------------------------------------------------------------------
def _make_kernel(n_tile, N1, n_axis, planar):
    """T is produced by se3_to_matrix, so its last row is [0,0,0,1] -> channel 3
    of the output is a pure copy of channel 3 of P (no VALU work, no casts)."""

    def kernel(t_ref, p_ref, o_ref):
        # t_ref: (B*N1*16,) f32 in SMEM (row-major flattened 4x4 transforms)
        # p_ref/o_ref: (1, n_tile, 4, s_tile[, 128]) blocks in VMEM
        b = pl.program_id(0)
        nb = pl.program_id(n_axis)
        for ln in range(n_tile):                        # small static unroll
            tn = 0 if N1 == 1 else nb * n_tile + ln     # T broadcast along N iff N1==1
            base = (b * N1 + tn) * 16
            if planar:
                o_ref[0, ln, 3] = p_ref[0, ln, 3]       # channel-3 shortcut
                for c in range(3):
                    acc = t_ref[base + 4 * c] * p_ref[0, ln, 0].astype(jnp.float32)
                    for k in range(1, 4):
                        acc = acc + t_ref[base + 4 * c + k] * p_ref[0, ln, k].astype(
                            jnp.float32
                        )
                    o_ref[0, ln, c] = acc.astype(o_ref.dtype)
            else:
                o_ref[0, ln, 3:4, :] = p_ref[0, ln, 3:4, :]
                for c in range(3):
                    acc = t_ref[base + 4 * c] * p_ref[0, ln, 0:1, :].astype(jnp.float32)
                    for k in range(1, 4):
                        acc = acc + t_ref[base + 4 * c + k] * p_ref[
                            0, ln, k : k + 1, :
                        ].astype(jnp.float32)
                    o_ref[0, ln, c : c + 1, :] = acc.astype(o_ref.dtype)

    return kernel


def se3_action(G, P):
    """G: (B, N1, 6) se3 log vectors; P: (B, N2, 4, H, W) homogeneous maps."""
    B, N1, _ = G.shape
    Bp, N2, C, H, W = P.shape
    assert B == Bp and C == 4
    assert N1 == N2 or N1 == 1 or N2 == 1, "torch broadcasting rule"
    N_out = max(N1, N2)
    HW = H * W
    itemsize = jnp.dtype(P.dtype).itemsize

    # Tiny exponential map stays in plain JAX; T rows feed SMEM scalar reads.
    T = se3_to_matrix(G).astype(jnp.float32)             # (B, N1, 4, 4)
    t_flat = T.reshape(-1)

    planar = (HW % LANE == 0)
    if planar:
        # Lane-dense channel planes (free view): block (1, n_tile, 4, s_tile, 128).
        S = HW // LANE
        Pf = P.reshape(B, N2, 4, S, LANE)
        gran = 8
        max_s_tile = max(gran, _MAX_BLOCK_BYTES // (4 * LANE * itemsize))
        s_tile = S if S <= max_s_tile else (max_s_tile // gran) * gran
    else:
        # Ragged spatial size: natural (B, N2, 4, HW) layout, edge block masked by
        # Pallas. No pad/slice HBM round trips; VMEM pads 4->8 sublanes (HBM-bound).
        S = HW
        Pf = P.reshape(B, N2, 4, HW)
        gran = LANE
        max_s_tile = max(gran, (_MAX_BLOCK_BYTES // (8 * itemsize)) // gran * gran)
        s_tile = S if S <= max_s_tile else max_s_tile
    s_blocks = _cdiv(S, s_tile)

    # Keep >= _MIN_GRID_STEPS grid steps (v7x dual-TC + DMA/compute overlap):
    # shrink the spatial tile only if (B, N) alone cannot provide them.
    if B * N_out * s_blocks < _MIN_GRID_STEPS:
        tgt = _cdiv(_MIN_GRID_STEPS, B * N_out)
        cand = max(gran, _cdiv(_cdiv(S, tgt), gran) * gran)
        if cand < S:
            s_tile = cand
            s_blocks = _cdiv(S, s_tile)

    # Fold several n into one block only in the small-image regime (single spatial
    # block), when P is not broadcast along N, without starving the grid.
    n_tile = 1
    if s_blocks == 1 and N2 == N_out and N_out > 1:
        if planar:
            per_n_bytes = 4 * s_tile * LANE * itemsize
        else:
            per_n_bytes = 8 * _cdiv(s_tile, LANE) * LANE * itemsize
        budget = max(1, _MAX_BLOCK_BYTES // per_n_bytes)
        grid_cap = max(1, (B * N_out) // _MIN_GRID_STEPS)
        cap = max(1, min(N_out, budget, _MAX_N_UNROLL, grid_cap))
        for cand in range(cap, 0, -1):
            if N_out % cand == 0:
                n_tile = cand
                break

    p_broadcast = (N2 == 1 and N_out > 1)
    if planar:
        blk = (1, n_tile, 4, s_tile, LANE)
        out_struct = jax.ShapeDtypeStruct((B, N_out, 4, S, LANE), P.dtype)
        if p_broadcast:
            # N innermost: consecutive steps reuse the same P block index, so the
            # pipeline elides the repeated HBM->VMEM fetch of the shared P tile.
            grid = (B, s_blocks, N_out // n_tile)
            n_axis = 2
            p_map = lambda b, s, n: (b, 0, 0, s, 0)
            o_map = lambda b, s, n: (b, n, 0, s, 0)
        else:
            grid = (B, N_out // n_tile, s_blocks)
            n_axis = 1
            p_map = lambda b, n, s: (b, n, 0, s, 0)
            o_map = lambda b, n, s: (b, n, 0, s, 0)
    else:
        blk = (1, n_tile, 4, s_tile)
        out_struct = jax.ShapeDtypeStruct((B, N_out, 4, HW), P.dtype)
        if p_broadcast:
            grid = (B, s_blocks, N_out // n_tile)
            n_axis = 2
            p_map = lambda b, s, n: (b, 0, 0, s)
            o_map = lambda b, s, n: (b, n, 0, s)
        else:
            grid = (B, N_out // n_tile, s_blocks)
            n_axis = 1
            p_map = lambda b, n, s: (b, n, 0, s)
            o_map = lambda b, n, s: (b, n, 0, s)

    # With the broadcast-aware grid ordering, P is read exactly B*N2 tiles' worth.
    cost = pl.CostEstimate(
        flops=21 * B * N_out * HW,                      # 3 rows x (4 mul + 3 add)/pixel
        transcendentals=0,
        bytes_accessed=(B * N2 + B * N_out) * 4 * HW * itemsize + int(t_flat.size) * 4,
    )

    out = pl.pallas_call(
        _make_kernel(n_tile, N1, n_axis, planar),
        out_shape=out_struct,
        grid_spec=pltpu.PrefetchScalarGridSpec(
            num_scalar_prefetch=0,
            grid=grid,
            in_specs=[
                pl.BlockSpec(memory_space=pltpu.MemorySpace.SMEM),   # T coefficients
                pl.BlockSpec(blk, p_map),                            # P blocks
            ],
            out_specs=pl.BlockSpec(blk, o_map),
        ),
        compiler_params=pltpu.CompilerParams(
            dimension_semantics=("parallel", "parallel", "parallel"),
        ),
        cost_estimate=cost,
    )(t_flat, Pf)

    return out.reshape(B, N_out, 4, H, W)


# ----------------------------------------------------------------------------
# LieOp module equivalent
# ----------------------------------------------------------------------------
class LieOp:
    def __init__(self, size=(1, 1), X0=None):
        if X0 is None:
            self.X = jnp.zeros((*size, 6), dtype=jnp.float32)
        else:
            self.X = jnp.asarray(X0, dtype=jnp.float32).reshape((*size, 6))

    def __call__(self, P):
        return se3_action(self.X, P)

    def matrix(self):
        return se3_to_matrix(self.X)

    def matrix_inv(self):
        return se3_to_matrix_inv(self.X)


if __name__ == "__main__":
    key = jax.random.PRNGKey(0)
    k1, k2, k3, k4, k5, k6 = jax.random.split(key, 6)

    def ref_action(X, P):
        T = se3_to_matrix(X).astype(jnp.float32)
        B_, N2_, _, H_, W_ = P.shape
        r = jnp.matmul(
            T,
            P.astype(jnp.float32).reshape(B_, N2_, 4, H_ * W_),
            precision=jax.lax.Precision.HIGHEST,
        )
        return r.reshape(B_, -1, 4, H_, W_)

    # Case 1: aligned spatial size (HW % 128 == 0), N1 == N2.
    B, N, H, W = 2, 4, 16, 16
    X0 = 0.1 * jax.random.normal(k1, (B, N, 6), dtype=jnp.float32)
    op = LieOp(size=(B, N), X0=X0)
    P = jax.random.normal(k2, (B, N, 4, H, W), dtype=jnp.float32)
    out = jax.block_until_ready(op(P))
    assert out.shape == (B, N, 4, H, W) and out.dtype == jnp.float32
    assert jnp.allclose(out, ref_action(op.X, P), atol=1e-5, rtol=1e-5), "case1 mismatch"

    # Case 2: ragged spatial size (HW % 128 != 0) + T broadcast along N (N1 == 1).
    B2, N2b, H2, W2 = 2, 3, 5, 7
    X1 = 0.1 * jax.random.normal(k3, (B2, 1, 6), dtype=jnp.float32)
    op2 = LieOp(size=(B2, 1), X0=X1)
    P2 = jax.random.normal(k4, (B2, N2b, 4, H2, W2), dtype=jnp.float32)
    out2 = jax.block_until_ready(op2(P2))
    assert out2.shape == (B2, N2b, 4, H2, W2)
    assert jnp.allclose(out2, ref_action(op2.X, P2), atol=1e-5, rtol=1e-5), "case2 mismatch"

    # Case 3: P broadcast along N (N2 == 1, N1 > 1) -> innermost-N grid, shared P
    # tile fetched once per (b, s) instead of N_out times.
    B3, N3, H3, W3 = 2, 4, 16, 8
    X2 = 0.1 * jax.random.normal(k5, (B3, N3, 6), dtype=jnp.float32)
    op3 = LieOp(size=(B3, N3), X0=X2)
    P3 = jax.random.normal(k6, (B3, 1, 4, H3, W3), dtype=jnp.float32)
    out3 = jax.block_until_ready(op3(P3))
    assert out3.shape == (B3, N3, 4, H3, W3)
    assert jnp.allclose(out3, ref_action(op3.X, P3), atol=1e-5, rtol=1e-5), "case3 mismatch"

    # Case 4: bf16 activations (half HBM bytes; f32 accumulation in-kernel).
    Pb = P.astype(jnp.bfloat16)
    outb = jax.block_until_ready(op(Pb))
    assert outb.shape == (B, N, 4, H, W) and outb.dtype == jnp.bfloat16
    refb = ref_action(op.X, Pb).astype(jnp.bfloat16).astype(jnp.float32)
    assert jnp.allclose(outb.astype(jnp.float32), refb, atol=3e-2, rtol=3e-2), "case4 mismatch"

    print("KERNEL_OK")
</pallas_src>

<mosaic_0001>
module attributes {stable_mosaic.version = 11 : i64} {
  func.func @kernel(%arg0: i32, %arg1: i32, %arg2: i32, %arg3: memref<128xf32, #tpu.memory_space<smem>>, %arg4: memref<1x1x4x2x128xf32, #tpu.memory_space<vmem>>, %arg5: memref<1x1x4x2x128xf32, #tpu.memory_space<vmem>>) attributes {dimension_semantics = [#tpu.dimension_semantics<parallel>, #tpu.dimension_semantics<parallel>, #tpu.dimension_semantics<parallel>], iteration_bounds = array<i64: 2, 4, 1>, scalar_prefetch = 0 : i64, scratch_operands = 0 : i64, tpu.core_type = #tpu.core_type<tc>, window_params = [{transform_indices = @transform_0, window_bounds = array<i64: 128>}, {transform_indices = @transform_1, window_bounds = array<i64: 1, 1, 4, 2, 128>}, {transform_indices = @transform_2, window_bounds = array<i64: 1, 1, 4, 2, 128>}]} {
    %c1_i32 = arith.constant 1 : i32
    %0 = arith.muli %arg1, %c1_i32 : i32
    %c0_i32 = arith.constant 0 : i32
    %1 = arith.addi %0, %c0_i32 : i32
    %c4_i32 = arith.constant 4 : i32
    %2 = arith.muli %arg0, %c4_i32 : i32
    %3 = arith.addi %2, %1 : i32
    %c16_i32 = arith.constant 16 : i32
    %4 = arith.muli %3, %c16_i32 : i32
    %c0 = arith.constant 0 : index
    %c0_0 = arith.constant 0 : index
    %c3 = arith.constant 3 : index
    %c0_1 = arith.constant 0 : index
    %c0_2 = arith.constant 0 : index
    %5 = vector.load %arg4[%c0, %c0_0, %c3, %c0_1, %c0_2] : memref<1x1x4x2x128xf32, #tpu.memory_space<vmem>>, vector<1x1x1x2x128xf32>
    %6 = vector.shape_cast %5 : vector<1x1x1x2x128xf32> to vector<2x128xf32>
    %c0_3 = arith.constant 0 : index
    %c0_4 = arith.constant 0 : index
    %c3_5 = arith.constant 3 : index
    %c0_6 = arith.constant 0 : index
    %c0_7 = arith.constant 0 : index
    %7 = vector.load %arg5[%c0_3, %c0_4, %c3_5, %c0_6, %c0_7] : memref<1x1x4x2x128xf32, #tpu.memory_space<vmem>>, vector<1x1x1x2x128xf32>
    %8 = vector.shape_cast %7 : vector<1x1x1x2x128xf32> to vector<2x128xf32>
    %9 = vector.shape_cast %6 : vector<2x128xf32> to vector<1x1x1x2x128xf32>
    tpu.vector_store %arg5[%c0_3, %c0_4, %c3_5, %c0_6, %c0_7], %9 {strides = array<i32>} : memref<1x1x4x2x128xf32, #tpu.memory_space<vmem>>, vector<1x1x1x2x128xf32>,
    %c0_i32_8 = arith.constant 0 : i32
    %10 = arith.addi %4, %c0_i32_8 : i32
    %11 = arith.index_cast %10 : i32 to index
    %12 = memref.load %arg3[%11] : memref<128xf32, #tpu.memory_space<smem>>
    %c0_9 = arith.constant 0 : index
    %c0_10 = arith.constant 0 : index
    %c0_11 = arith.constant 0 : index
    %c0_12 = arith.constant 0 : index
    %c0_13 = arith.constant 0 : index
    %13 = vector.load %arg4[%c0_9, %c0_10, %c0_11, %c0_12, %c0_13] : memref<1x1x4x2x128xf32, #tpu.memory_space<vmem>>, vector<1x1x1x2x128xf32>
    %14 = vector.shape_cast %13 : vector<1x1x1x2x128xf32> to vector<2x128xf32>
    %15 = vector.broadcast %12 : f32 to vector<2x128xf32>
    %16 = arith.mulf %15, %14 : vector<2x128xf32>
    %c0_i32_14 = arith.constant 0 : i32
    %17 = arith.addi %4, %c0_i32_14 : i32
    %c1_i32_15 = arith.constant 1 : i32
    %18 = arith.addi %17, %c1_i32_15 : i32
    %19 = arith.index_cast %18 : i32 to index
    %20 = memref.load %arg3[%19] : memref<128xf32, #tpu.memory_space<smem>>
    %c0_16 = arith.constant 0 : index
    %c0_17 = arith.constant 0 : index
    %c1 = arith.constant 1 : index
    %c0_18 = arith.constant 0 : index
    %c0_19 = arith.constant 0 : index
    %21 = vector.load %arg4[%c0_16, %c0_17, %c1, %c0_18, %c0_19] : memref<1x1x4x2x128xf32, #tpu.memory_space<vmem>>, vector<1x1x1x2x128xf32>
    %22 = vector.shape_cast %21 : vector<1x1x1x2x128xf32> to vector<2x128xf32>
    %23 = vector.broadcast %20 : f32 to vector<2x128xf32>
    %24 = arith.mulf %23, %22 : vector<2x128xf32>
    %25 = arith.addf %16, %24 : vector<2x128xf32>
    %c0_i32_20 = arith.constant 0 : i32
    %26 = arith.addi %4, %c0_i32_20 : i32
    %c2_i32 = arith.constant 2 : i32
    %27 = arith.addi %26, %c2_i32 : i32
    %28 = arith.index_cast %27 : i32 to index
    %29 = memref.load %arg3[%28] : memref<128xf32, #tpu.memory_space<smem>>
    %c0_21 = arith.constant 0 : index
    %c0_22 = arith.constant 0 : index
    %c2 = arith.constant 2 : index
    %c0_23 = arith.constant 0 : index
    %c0_24 = arith.constant 0 : index
    %30 = vector.load %arg4[%c0_21, %c0_22, %c2, %c0_23, %c0_24] : memref<1x1x4x2x128xf32, #tpu.memory_space<vmem>>, vector<1x1x1x2x128xf32>
    %31 = vector.shape_cast %30 : vector<1x1x1x2x128xf32> to vector<2x128xf32>
    %32 = vector.broadcast %29 : f32 to vector<2x128xf32>
    %33 = arith.mulf %32, %31 : vector<2x128xf32>
    %34 = arith.addf %25, %33 : vector<2x128xf32>
    %c0_i32_25 = arith.constant 0 : i32
    %35 = arith.addi %4, %c0_i32_25 : i32
    %c3_i32 = arith.constant 3 : i32
    %36 = arith.addi %35, %c3_i32 : i32
    %37 = arith.index_cast %36 : i32 to index
    %38 = memref.load %arg3[%37] : memref<128xf32, #tpu.memory_space<smem>>
    %c0_26 = arith.constant 0 : index
    %c0_27 = arith.constant 0 : index
    %c3_28 = arith.constant 3 : index
    %c0_29 = arith.constant 0 : index
    %c0_30 = arith.constant 0 : index
    %39 = vector.load %arg4[%c0_26, %c0_27, %c3_28, %c0_29, %c0_30] : memref<1x1x4x2x128xf32, #tpu.memory_space<vmem>>, vector<1x1x1x2x128xf32>
    %40 = vector.shape_cast %39 : vector<1x1x1x2x128xf32> to vector<2x128xf32>
    %41 = vector.broadcast %38 : f32 to vector<2x128xf32>
    %42 = arith.mulf %41, %40 : vector<2x128xf32>
    %43 = arith.addf %34, %42 : vector<2x128xf32>
    %c0_31 = arith.constant 0 : index
    %c0_32 = arith.constant 0 : index
    %c0_33 = arith.constant 0 : index
    %c0_34 = arith.constant 0 : index
    %c0_35 = arith.constant 0 : index
    %44 = vector.load %arg5[%c0_31, %c0_32, %c0_33, %c0_34, %c0_35] : memref<1x1x4x2x128xf32, #tpu.memory_space<vmem>>, vector<1x1x1x2x128xf32>
    %45 = vector.shape_cast %44 : vector<1x1x1x2x128xf32> to vector<2x128xf32>
    %46 = vector.shape_cast %43 : vector<2x128xf32> to vector<1x1x1x2x128xf32>
    tpu.vector_store %arg5[%c0_31, %c0_32, %c0_33, %c0_34, %c0_35], %46 {strides = array<i32>} : memref<1x1x4x2x128xf32, #tpu.memory_space<vmem>>, vector<1x1x1x2x128xf32>,
    %c4_i32_36 = arith.constant 4 : i32
    %47 = arith.addi %4, %c4_i32_36 : i32
    %48 = arith.index_cast %47 : i32 to index
    %49 = memref.load %arg3[%48] : memref<128xf32, #tpu.memory_space<smem>>
    %c0_37 = arith.constant 0 : index
    %c0_38 = arith.constant 0 : index
    %c0_39 = arith.constant 0 : index
    %c0_40 = arith.constant 0 : index
    %c0_41 = arith.constant 0 : index
    %50 = vector.load %arg4[%c0_37, %c0_38, %c0_39, %c0_40, %c0_41] : memref<1x1x4x2x128xf32, #tpu.memory_space<vmem>>, vector<1x1x1x2x128xf32>
    %51 = vector.shape_cast %50 : vector<1x1x1x2x128xf32> to vector<2x128xf32>
    %52 = vector.broadcast %49 : f32 to vector<2x128xf32>
    %53 = arith.mulf %52, %51 : vector<2x128xf32>
    %c4_i32_42 = arith.constant 4 : i32
    %54 = arith.addi %4, %c4_i32_42 : i32
    %c1_i32_43 = arith.constant 1 : i32
    %55 = arith.addi %54, %c1_i32_43 : i32
    %56 = arith.index_cast %55 : i32 to index
    %57 = memref.load %arg3[%56] : memref<128xf32, #tpu.memory_space<smem>>
    %c0_44 = arith.constant 0 : index
    %c0_45 = arith.constant 0 : index
    %c1_46 = arith.constant 1 : index
    %c0_47 = arith.constant 0 : index
    %c0_48 = arith.constant 0 : index
    %58 = vector.load %arg4[%c0_44, %c0_45, %c1_46, %c0_47, %c0_48] : memref<1x1x4x2x128xf32, #tpu.memory_space<vmem>>, vector<1x1x1x2x128xf32>
    %59 = vector.shape_cast %58 : vector<1x1x1x2x128xf32> to vector<2x128xf32>
    %60 = vector.broadcast %57 : f32 to vector<2x128xf32>
    %61 = arith.mulf %60, %59 : vector<2x128xf32>
    %62 = arith.addf %53, %61 : vector<2x128xf32>
    %c4_i32_49 = arith.constant 4 : i32
    %63 = arith.addi %4, %c4_i32_49 : i32
    %c2_i32_50 = arith.constant 2 : i32
    %64 = arith.addi %63, %c2_i32_50 : i32
    %65 = arith.index_cast %64 : i32 to index
    %66 = memref.load %arg3[%65] : memref<128xf32, #tpu.memory_space<smem>>
    %c0_51 = arith.constant 0 : index
    %c0_52 = arith.constant 0 : index
    %c2_53 = arith.constant 2 : index
    %c0_54 = arith.constant 0 : index
    %c0_55 = arith.constant 0 : index
    %67 = vector.load %arg4[%c0_51, %c0_52, %c2_53, %c0_54, %c0_55] : memref<1x1x4x2x128xf32, #tpu.memory_space<vmem>>, vector<1x1x1x2x128xf32>
    %68 = vector.shape_cast %67 : vector<1x1x1x2x128xf32> to vector<2x128xf32>
    %69 = vector.broadcast %66 : f32 to vector<2x128xf32>
    %70 = arith.mulf %69, %68 : vector<2x128xf32>
    %71 = arith.addf %62, %70 : vector<2x128xf32>
    %c4_i32_56 = arith.constant 4 : i32
    %72 = arith.addi %4, %c4_i32_56 : i32
    %c3_i32_57 = arith.constant 3 : i32
    %73 = arith.addi %72, %c3_i32_57 : i32
    %74 = arith.index_cast %73 : i32 to index
    %75 = memref.load %arg3[%74] : memref<128xf32, #tpu.memory_space<smem>>
    %c0_58 = arith.constant 0 : index
    %c0_59 = arith.constant 0 : index
    %c3_60 = arith.constant 3 : index
    %c0_61 = arith.constant 0 : index
    %c0_62 = arith.constant 0 : index
    %76 = vector.load %arg4[%c0_58, %c0_59, %c3_60, %c0_61, %c0_62] : memref<1x1x4x2x128xf32, #tpu.memory_space<vmem>>, vector<1x1x1x2x128xf32>
    %77 = vector.shape_cast %76 : vector<1x1x1x2x128xf32> to vector<2x128xf32>
    %78 = vector.broadcast %75 : f32 to vector<2x128xf32>
    %79 = arith.mulf %78, %77 : vector<2x128xf32>
    %80 = arith.addf %71, %79 : vector<2x128xf32>
    %c0_63 = arith.constant 0 : index
    %c0_64 = arith.constant 0 : index
    %c1_65 = arith.constant 1 : index
    %c0_66 = arith.constant 0 : index
    %c0_67 = arith.constant 0 : index
    %81 = vector.load %arg5[%c0_63, %c0_64, %c1_65, %c0_66, %c0_67] : memref<1x1x4x2x128xf32, #tpu.memory_space<vmem>>, vector<1x1x1x2x128xf32>
    %82 = vector.shape_cast %81 : vector<1x1x1x2x128xf32> to vector<2x128xf32>
    %83 = vector.shape_cast %80 : vector<2x128xf32> to vector<1x1x1x2x128xf32>
    tpu.vector_store %arg5[%c0_63, %c0_64, %c1_65, %c0_66, %c0_67], %83 {strides = array<i32>} : memref<1x1x4x2x128xf32, #tpu.memory_space<vmem>>, vector<1x1x1x2x128xf32>,
    %c8_i32 = arith.constant 8 : i32
    %84 = arith.addi %4, %c8_i32 : i32
    %85 = arith.index_cast %84 : i32 to index
    %86 = memref.load %arg3[%85] : memref<128xf32, #tpu.memory_space<smem>>
    %c0_68 = arith.constant 0 : index
    %c0_69 = arith.constant 0 : index
    %c0_70 = arith.constant 0 : index
    %c0_71 = arith.constant 0 : index
    %c0_72 = arith.constant 0 : index
    %87 = vector.load %arg4[%c0_68, %c0_69, %c0_70, %c0_71, %c0_72] : memref<1x1x4x2x128xf32, #tpu.memory_space<vmem>>, vector<1x1x1x2x128xf32>
    %88 = vector.shape_cast %87 : vector<1x1x1x2x128xf32> to vector<2x128xf32>
    %89 = vector.broadcast %86 : f32 to vector<2x128xf32>
    %90 = arith.mulf %89, %88 : vector<2x128xf32>
    %c8_i32_73 = arith.constant 8 : i32
    %91 = arith.addi %4, %c8_i32_73 : i32
    %c1_i32_74 = arith.constant 1 : i32
    %92 = arith.addi %91, %c1_i32_74 : i32
    %93 = arith.index_cast %92 : i32 to index
    %94 = memref.load %arg3[%93] : memref<128xf32, #tpu.memory_space<smem>>
    %c0_75 = arith.constant 0 : index
    %c0_76 = arith.constant 0 : index
    %c1_77 = arith.constant 1 : index
    %c0_78 = arith.constant 0 : index
    %c0_79 = arith.constant 0 : index
    %95 = vector.load %arg4[%c0_75, %c0_76, %c1_77, %c0_78, %c0_79] : memref<1x1x4x2x128xf32, #tpu.memory_space<vmem>>, vector<1x1x1x2x128xf32>
    %96 = vector.shape_cast %95 : vector<1x1x1x2x128xf32> to vector<2x128xf32>
    %97 = vector.broadcast %94 : f32 to vector<2x128xf32>
    %98 = arith.mulf %97, %96 : vector<2x128xf32>
    %99 = arith.addf %90, %98 : vector<2x128xf32>
    %c8_i32_80 = arith.constant 8 : i32
    %100 = arith.addi %4, %c8_i32_80 : i32
    %c2_i32_81 = arith.constant 2 : i32
    %101 = arith.addi %100, %c2_i32_81 : i32
    %102 = arith.index_cast %101 : i32 to index
    %103 = memref.load %arg3[%102] : memref<128xf32, #tpu.memory_space<smem>>
    %c0_82 = arith.constant 0 : index
    %c0_83 = arith.constant 0 : index
    %c2_84 = arith.constant 2 : index
    %c0_85 = arith.constant 0 : index
    %c0_86 = arith.constant 0 : index
    %104 = vector.load %arg4[%c0_82, %c0_83, %c2_84, %c0_85, %c0_86] : memref<1x1x4x2x128xf32, #tpu.memory_space<vmem>>, vector<1x1x1x2x128xf32>
    %105 = vector.shape_cast %104 : vector<1x1x1x2x128xf32> to vector<2x128xf32>
    %106 = vector.broadcast %103 : f32 to vector<2x128xf32>
    %107 = arith.mulf %106, %105 : vector<2x128xf32>
    %108 = arith.addf %99, %107 : vector<2x128xf32>
    %c8_i32_87 = arith.constant 8 : i32
    %109 = arith.addi %4, %c8_i32_87 : i32
    %c3_i32_88 = arith.constant 3 : i32
    %110 = arith.addi %109, %c3_i32_88 : i32
    %111 = arith.index_cast %110 : i32 to index
    %112 = memref.load %arg3[%111] : memref<128xf32, #tpu.memory_space<smem>>
    %c0_89 = arith.constant 0 : index
    %c0_90 = arith.constant 0 : index
    %c3_91 = arith.constant 3 : index
    %c0_92 = arith.constant 0 : index
    %c0_93 = arith.constant 0 : index
    %113 = vector.load %arg4[%c0_89, %c0_90, %c3_91, %c0_92, %c0_93] : memref<1x1x4x2x128xf32, #tpu.memory_space<vmem>>, vector<1x1x1x2x128xf32>
    %114 = vector.shape_cast %113 : vector<1x1x1x2x128xf32> to vector<2x128xf32>
    %115 = vector.broadcast %112 : f32 to vector<2x128xf32>
    %116 = arith.mulf %115, %114 : vector<2x128xf32>
    %117 = arith.addf %108, %116 : vector<2x128xf32>
    %c0_94 = arith.constant 0 : index
    %c0_95 = arith.constant 0 : index
    %c2_96 = arith.constant 2 : index
    %c0_97 = arith.constant 0 : index
    %c0_98 = arith.constant 0 : index
    %118 = vector.load %arg5[%c0_94, %c0_95, %c2_96, %c0_97, %c0_98] : memref<1x1x4x2x128xf32, #tpu.memory_space<vmem>>, vector<1x1x1x2x128xf32>
    %119 = vector.shape_cast %118 : vector<1x1x1x2x128xf32> to vector<2x128xf32>
    %120 = vector.shape_cast %117 : vector<2x128xf32> to vector<1x1x1x2x128xf32>
    tpu.vector_store %arg5[%c0_94, %c0_95, %c2_96, %c0_97, %c0_98], %120 {strides = array<i32>} : memref<1x1x4x2x128xf32, #tpu.memory_space<vmem>>, vector<1x1x1x2x128xf32>,
    return
  }
  func.func @transform_0(%arg0: i32, %arg1: i32, %arg2: i32) -> i32 {
    %c0_i32 = arith.constant 0 : i32
    %c0_i32_0 = arith.constant 0 : i32
    return %c0_i32 : i32
  }
  func.func @transform_1(%arg0: i32, %arg1: i32, %arg2: i32) -> (i32, i32, i32, i32, i32) {
    %c0_i32 = arith.constant 0 : i32
    %c0_i32_0 = arith.constant 0 : i32
    %c0_i32_1 = arith.constant 0 : i32
    return %arg0, %arg1, %c0_i32, %arg2, %c0_i32_0 : i32, i32, i32, i32, i32
  }
  func.func @transform_2(%arg0: i32, %arg1: i32, %arg2: i32) -> (i32, i32, i32, i32, i32) {
    %c0_i32 = arith.constant 0 : i32
    %c0_i32_0 = arith.constant 0 : i32
    %c0_i32_1 = arith.constant 0 : i32
    return %arg0, %arg1, %c0_i32, %arg2, %c0_i32_0 : i32, i32, i32, i32, i32
  }
}

</mosaic_0001>

<llo_original>
// kernel: tpu_custom_call.1
$region0: #{tpu_custom_call.1}
  #allocation0 [shape = 'u32[]', space=smem, size = 0x4, offset = 0x4, fixed_abs, tag = 'smem constant byte address 0x4 - core index']
  #allocation1 [shape = 'u32[144,128]{1,0:T(1,128)}', space=vmem, size = 0x12000, scoped, tag = 'internal scratch']
  %s0 = inlined_call_operand.hbm [shape: f32[128], index: 0, kind: input, shape index: {}]
  %s1 = inlined_call_operand.hbm [shape: f32[2,4,4,2,128], index: 1, kind: input, shape index: {}]
  %s2 = inlined_call_operand.hbm [shape: f32[2,4,4,2,128], index: 2, kind: output, shape index: {}]
  %s3 = sld [smem:[#allocation0]]
  $region49: #{tpu_custom_call.1} parent=0
    _
  %s5 = ssub.s32 1, %s3
  %s6 = scalar_select 0, %s5, %s3
  $region1: #{tpu_custom_call.1} parent=0
    #allocation2 [shape = 'u8[512]{0}', space=smem, size = 0x200, scoped, tag = 'input window, operand 0, single buffered']
    #allocation3 [shape = 's32[2]{0}', space=sflag, size = 0x8, scoped, tag = 'scoped memory for tpu_custom_call.1']
    #allocation4 [shape = 's32[2]{0}', space=sflag, size = 0x8, scoped, tag = 'scoped memory for tpu_custom_call.1']
    #allocation5 [shape = 's32[2]{0}', space=sflag, size = 0x8, scoped, tag = 'scoped memory for tpu_custom_call.1']
    #allocation6 [shape = 'u8[8192]{0}', space=vmem, size = 0x2000, scoped, tag = 'input window, operand 1']
    #allocation7 [shape = 'u8[8192]{0}', space=vmem, size = 0x2000, scoped, tag = 'output window, operand 0']
    %7 = vsyncpa [#allocation5], 0
    %8 = vsyncpa [#allocation3], 0
    %s9 = scalar_lea.sflag [#allocation3], 1
    %10 = vsyncpa %s9, 0
    %11 = vsyncpa [#allocation4], 0
    %s12 = scalar_lea.sflag [#allocation4], 1
    %13 = vsyncpa %s12, 0
    loop: start=0, step=1, limit=10
    $region2: #{tpu_custom_call.1} parent=1 // loop_pre_header
      _
    $region3: #{tpu_custom_call.1} parent=1 // loop_header
      %s15 = sphi 0, %s19
      %p16 = scmp.ge.s32.totalorder %s15, 10
      %s22 = sphi 0, %s41
      %s23 = sphi 0, %s37
      %s24 = sphi 0, %s33
      %s25 = sphi 0, %s22
      %s26 = sphi 0, %s23
      %s27 = sphi 0, %s24
      %s28 = sphi 0, %s25
      %s29 = sphi 0, %s26
      %s30 = sphi 0, %s27
      %s42 = sphi 0, %s42
      %s44 = sphi 0, %s42
      %s45 = sphi 0, %s44
      %s59 = sphi 0, %s45
      %s69 = sphi 0, %s71
      %s72 = sphi 0, %s69
      %s73 = sphi 0, %s72
      %s89 = sphi 0, %s73
      %s99 = sphi 0, %s101
      %s102 = sphi 0, %s99
      %s103 = sphi 0, %s102
      %s119 = sphi 0, %s103
    $region4: #{tpu_custom_call.1} parent=1 // loop_header_branch
      %18 = sbr.rel (%p16) target = $region8
    $region5: #{tpu_custom_call.1} parent=1 // loop_body
      %s20 = ssub.s32 %s15, 1
      %s21 = ssub.s32 %s15, 2
      %s31 = sadd.s32 1, %s24
      %p32 = scmp.ge.s32.totalorder %s31, 1
      %s33 = scalar_select %p32, 0, %s31
      %s34 = sadd.s32 1, %s23
      %s35 = scalar_select %p32, %s34, %s23
      %p36 = scmp.ge.s32.totalorder %s35, 4
      %s37 = scalar_select %p36, 0, %s35
      %s38 = sadd.s32 1, %s22
      %s39 = scalar_select %p36, %s38, %s22
      %p40 = scmp.ge.s32.totalorder %s39, 2
      %s41 = scalar_select %p40, 0, %s39
      %s43 = sadd.s32 %s42, 1
      %p46 = scmp.eq.s32.totalorder %s15, 7
      %p47 = scmp.ne.s32.totalorder %s42, %s44
      %p48 = scmp.eq.s32.totalorder %s15, 0
      %p49 = por %p47, %p48
      %p50 = scmp.ne.s32.totalorder %s42, %s44
      %p51 = scmp.eq.s32.totalorder %s20, 7
      %p52 = por %p50, %p51
      %p53 = scmp.ne.s32.totalorder %s44, %s45
      %p54 = scmp.eq.s32.totalorder %s20, 0
      %p55 = por %p53, %p54
      %p56 = scmp.ne.s32.totalorder %s44, %s45
      %p57 = scmp.eq.s32.totalorder %s21, 7
      %p58 = por %p56, %p57
      %p60 = scmp.ne.s32.totalorder %s45, %s59
      %p61 = scmp.eq.s32.totalorder %s21, 0
      %p62 = por %p60, %p61
      %s63 = ssub.s32 %s22, %s41
      %s64 = ssub.s32 %s23, %s37
      %s65 = sor.u32 %s63, %s64
      %s66 = ssub.s32 %s24, %s33
      %s67 = sor.u32 %s65, %s66
      %p68 = scmp.eq.s32.totalorder %s67, 0
      %s70 = sadd.s32 %s69, 1
      %s71 = scalar_select %p68, %s69, %s70
      %p74 = pneg %p68
      %p75 = scmp.eq.s32.totalorder %s15, 7
      %p76 = por %p74, %p75
      %p77 = scmp.ne.s32.totalorder %s69, %s72
      %p78 = scmp.eq.s32.totalorder %s15, 0
      %p79 = por %p77, %p78
      %p80 = scmp.ne.s32.totalorder %s69, %s72
      %p81 = scmp.eq.s32.totalorder %s20, 7
      %p82 = por %p80, %p81
      %p83 = scmp.ne.s32.totalorder %s72, %s73
      %p84 = scmp.eq.s32.totalorder %s20, 0
      %p85 = por %p83, %p84
      %p86 = scmp.ne.s32.totalorder %s72, %s73
      %p87 = scmp.eq.s32.totalorder %s21, 7
      %p88 = por %p86, %p87
      %p90 = scmp.ne.s32.totalorder %s73, %s89
      %p91 = scmp.eq.s32.totalorder %s21, 0
      %p92 = por %p90, %p91
      %s93 = ssub.s32 %s22, %s41
      %s94 = ssub.s32 %s23, %s37
      %s95 = sor.u32 %s93, %s94
      %s96 = ssub.s32 %s24, %s33
      %s97 = sor.u32 %s95, %s96
      %p98 = scmp.eq.s32.totalorder %s97, 0
      %s100 = sadd.s32 %s99, 1
      %s101 = scalar_select %p98, %s99, %s100
      %p104 = pneg %p98
      %p105 = scmp.eq.s32.totalorder %s15, 7
      %p106 = por %p104, %p105
      %p107 = scmp.ne.s32.totalorder %s99, %s102
      %p108 = scmp.eq.s32.totalorder %s15, 0
      %p109 = por %p107, %p108
      %p110 = scmp.ne.s32.totalorder %s99, %s102
      %p111 = scmp.eq.s32.totalorder %s20, 7
      %p112 = por %p110, %p111
      %p113 = scmp.ne.s32.totalorder %s102, %s103
      %p114 = scmp.eq.s32.totalorder %s20, 0
      %p115 = por %p113, %p114
      %p116 = scmp.ne.s32.totalorder %s102, %s103
      %p117 = scmp.eq.s32.totalorder %s21, 7
      %p118 = por %p116, %p117
      %p120 = scmp.ne.s32.totalorder %s103, %s119
      %p121 = scmp.eq.s32.totalorder %s21, 0
      %p122 = por %p120, %p121
      %p123 = scmp.le.s32.totalorder 1, %s15
      %p124 = scmp.lt.s32.totalorder %s15, 9
      %p125 = pnand %p123, %p124
      %p126 = pneg %p125
      // Predicated region
      $region9: #{tpu_custom_call.1} parent=5 // pred_check
        _
      $region10: #{tpu_custom_call.1} parent=5 // pred_check_branch
        %128 = sbr.rel (%p125) target = $region12
      $region11: #{tpu_custom_call.1} parent=5 // pred_region
        %s129 = ssub.s32 %s15, 1
        // Predicated region
        $region13: #{tpu_custom_call.1} parent=11 // pred_check
          %p130 = pneg %p55
        $region14: #{tpu_custom_call.1} parent=11 // pred_check_branch
          %132 = sbr.rel (%p130) target = $region16
        $region15: #{tpu_custom_call.1} parent=11 // pred_region
          %s134 = ssub.s32 16, 16
          %135 = vsyncadd [#allocation5], %s134
          %138 = dma.hbm_to_smem %s0, 16, [#allocation2], [#allocation5]
        $region16: #{tpu_custom_call.1} parent=11 // pred_fallthru
          _
      $region12: #{tpu_custom_call.1} parent=5 // pred_fallthru
        _
      %p139 = scmp.lt.s32.totalorder %s15, 8
      // Predicated region
      $region17: #{tpu_custom_call.1} parent=5 // pred_check
        %p140 = pneg %p139
      $region18: #{tpu_custom_call.1} parent=5 // pred_check_branch
        %142 = sbr.rel (%p140) target = $region20
      $region19: #{tpu_custom_call.1} parent=5 // pred_region
        // Predicated region
        $region21: #{tpu_custom_call.1} parent=19 // pred_check
          %p143 = pneg %p79
        $region22: #{tpu_custom_call.1} parent=19 // pred_check_branch
          %145 = sbr.rel (%p143) target = $region24
        $region23: #{tpu_custom_call.1} parent=19 // pred_region
          %s146 = sand.u32 %s69, 1
          %s147 = scalar_lea.sflag [#allocation3], %s146
          %s148 = sand.u32 %s69, 1
          %s149 = smul.addr %s148, 8
          %s150 = scalar_lea.vmem [#allocation6], %s149
          %s152 = ssub.s32 128, 128
          %153 = vsyncadd %s147, %s152
          %s154 = smul.addr %s23, 4
          %s155 = sadd.s32 %s24, %s154
          %s156 = smul.addr %s22, 16
          %s157 = sadd.s32 %s155, %s156
          %s158 = smul.addr %s157, 32
          %s159 = scalar_lea.hbm %s1, %s158
          %s160 = sshll.u32 %s150, 4
          %s161 = int_to_ptr.vmem [resolvable:$true] %s160
          %166 = dma.hbm_to_vmem [thread:$0]  %s159, 128, %s161, %s147, 32, 32, 2
        $region24: #{tpu_custom_call.1} parent=19 // pred_fallthru
          _
      $region20: #{tpu_custom_call.1} parent=5 // pred_fallthru
        _
      %p167 = scmp.le.s32.totalorder 1, %s15
      %p168 = scmp.lt.s32.totalorder %s15, 9
      %p169 = pnand %p167, %p168
      %p170 = pneg %p169
      // Predicated region
      $region25: #{tpu_custom_call.1} parent=5 // pred_check
        _
      $region26: #{tpu_custom_call.1} parent=5 // pred_check_branch
        %172 = sbr.rel (%p169) target = $region28
      $region27: #{tpu_custom_call.1} parent=5 // pred_region
        %s173 = ssub.s32 %s15, 1
        // Predicated region
        $region29: #{tpu_custom_call.1} parent=27 // pred_check
          %p174 = pneg %p55
        $region30: #{tpu_custom_call.1} parent=27 // pred_check_branch
          %176 = sbr.rel (%p174) target = $region32
        $region31: #{tpu_custom_call.1} parent=27 // pred_region
          %177 = dma.done [#allocation5], 16
        $region32: #{tpu_custom_call.1} parent=27 // pred_fallthru
          _
        %s178 = sand.u32 %s72, 1
        %s179 = scalar_lea.sflag [#allocation3], %s178
        %s180 = sand.u32 %s72, 1
        %s181 = smul.addr %s180, 8
        %s182 = scalar_lea.vmem [#allocation6], %s181
        // Predicated region
        $region33: #{tpu_custom_call.1} parent=27 // pred_check
          %p183 = pneg %p85
        $region34: #{tpu_custom_call.1} parent=27 // pred_check_branch
          %185 = sbr.rel (%p183) target = $region36
        $region35: #{tpu_custom_call.1} parent=27 // pred_region
          %186 = dma.done %s179, 128
        $region36: #{tpu_custom_call.1} parent=27 // pred_fallthru
          _
        %187 = sfence
        %p188 = pneg %p55
        %p189 = pneg %p52
        %s190 = sand.u32 %s72, 1
        %s191 = scalar_lea.sflag [#allocation3], %s190
        %s192 = sand.u32 %s72, 1
        %s193 = smul.addr %s192, 8
        %s194 = scalar_lea.vmem [#allocation6], %s193
        %p195 = pneg %p85
        %p196 = pneg %p82
        %p197 = pneg %p115
        %p198 = pneg %p112
        %s199 = sand.u32 %s102, 1
        %s200 = scalar_lea.sflag [#allocation4], %s199
        %s201 = sand.u32 %s102, 1
        %s202 = smul.addr %s201, 8
        %s203 = scalar_lea.vmem [#allocation7], %s202
        %s204 = smul.u32 %s25, 4
        %s205 = sadd.s32 %s204, %s26
        %s206 = smul.u32 %s205, 16
        %s207 = scalar_lea.vmem %s182, 6 [#allocation6]
        %v208 = vld [vmem:[%s207] sm:$0x3]
        %s209 = scalar_lea.vmem %s203, 6 [#allocation7]
        %210 = vst [vmem:[%s209] sm:$0x3] %v208
        %s211 = sld [smem:[#allocation2 + %s206]]
        %v212 = vld [vmem:[%s182] sm:$0x3]
        %v213 = vstv %s211
        %v214 = vmul.f32 %v213, %v212
        %s215 = sadd.s32 %s206, 1
        %s216 = sld [smem:[#allocation2 + %s215]]
        %s217 = scalar_lea.vmem %s182, 2 [#allocation6]
        %v218 = vld [vmem:[%s217] sm:$0x3]
        %v219 = vstv %s216
        %v220 = vmul.f32 %v219, %v218
        %v221 = vadd.f32 %v214, %v220
        %s222 = sadd.s32 %s206, 2
        %s223 = sld [smem:[#allocation2 + %s222]]
        %s224 = scalar_lea.vmem %s182, 4 [#allocation6]
        %v225 = vld [vmem:[%s224] sm:$0x3]
        %v226 = vstv %s223
        %v227 = vmul.f32 %v226, %v225
        %v228 = vadd.f32 %v221, %v227
        %s229 = sadd.s32 %s206, 3
        %s230 = sld [smem:[#allocation2 + %s229]]
        %v231 = vld [vmem:[%s207] sm:$0x3]
        %v232 = vstv %s230
        %v233 = vmul.f32 %v232, %v231
        %v234 = vadd.f32 %v228, %v233
        %235 = vst [vmem:[%s203] sm:$0x3] %v234
        %s236 = sadd.s32 %s206, 4
        %s237 = sld [smem:[#allocation2 + %s236]]
        %v238 = vld [vmem:[%s182] sm:$0x3]
        %v239 = vstv %s237
        %v240 = vmul.f32 %v239, %v238
        %s241 = sadd.s32 %s206, 5
        %s242 = sld [smem:[#allocation2 + %s241]]
        %v243 = vld [vmem:[%s217] sm:$0x3]
        %v244 = vstv %s242
        %v245 = vmul.f32 %v244, %v243
        %v246 = vadd.f32 %v240, %v245
        %s247 = sadd.s32 %s206, 6
        %s248 = sld [smem:[#allocation2 + %s247]]
        %v249 = vld [vmem:[%s224] sm:$0x3]
        %v250 = vstv %s248
        %v251 = vmul.f32 %v250, %v249
        %v252 = vadd.f32 %v246, %v251
        %s253 = sadd.s32 %s206, 7
        %s254 = sld [smem:[#allocation2 + %s253]]
        %v255 = vld [vmem:[%s207] sm:$0x3]
        %v256 = vstv %s254
        %v257 = vmul.f32 %v256, %v255
        %v258 = vadd.f32 %v252, %v257
        %s259 = scalar_lea.vmem %s203, 2 [#allocation7]
        %260 = vst [vmem:[%s259] sm:$0x3] %v258
        %s261 = sadd.s32 %s206, 8
        %s262 = sld [smem:[#allocation2 + %s261]]
        %v263 = vld [vmem:[%s182] sm:$0x3]
        %v264 = vstv %s262
        %v265 = vmul.f32 %v264, %v263
        %s266 = sadd.s32 %s206, 9
        %s267 = sld [smem:[#allocation2 + %s266]]
        %v268 = vld [vmem:[%s217] sm:$0x3]
        %v269 = vstv %s267
        %v270 = vmul.f32 %v269, %v268
        %v271 = vadd.f32 %v265, %v270
        %s272 = sadd.s32 %s206, 10
        %s273 = sld [smem:[#allocation2 + %s272]]
        %v274 = vld [vmem:[%s224] sm:$0x3]
        %v275 = vstv %s273
        %v276 = vmul.f32 %v275, %v274
        %v277 = vadd.f32 %v271, %v276
        %s278 = sadd.s32 %s206, 11
        %s279 = sld [smem:[#allocation2 + %s278]]
        %v280 = vld [vmem:[%s207] sm:$0x3]
        %v281 = vstv %s279
        %v282 = vmul.f32 %v281, %v280
        %v283 = vadd.f32 %v277, %v282
        %s284 = scalar_lea.vmem %s203, 4 [#allocation7]
        %285 = vst [vmem:[%s284] sm:$0x3] %v283
        %s286 = sand.u32 %s102, 1
        %s287 = scalar_lea.sflag [#allocation4], %s286
        %s288 = sand.u32 %s102, 1
        %s289 = smul.addr %s288, 8
        %s290 = scalar_lea.vmem [#allocation7], %s289
        // Predicated region
        $region37: #{tpu_custom_call.1} parent=27 // pred_check
          %p291 = pneg %p112
        $region38: #{tpu_custom_call.1} parent=27 // pred_check_branch
          %293 = sbr.rel (%p291) target = $region40
        $region39: #{tpu_custom_call.1} parent=27 // pred_region
          %s295 = ssub.s32 128, 128
          %296 = vsyncadd %s287, %s295
          %s297 = smul.addr %s26, 4
          %s298 = sadd.s32 %s27, %s297
          %s299 = smul.addr %s25, 16
          %s300 = sadd.s32 %s298, %s299
          %s301 = smul.addr %s300, 32
          %s302 = scalar_lea.hbm %s2, %s301
          %s303 = sshll.u32 %s290, 4
          %s304 = int_to_ptr.vmem [resolvable:$true] %s303
          %309 = dma.vmem_to_hbm [thread:$0]  %s304, 128, %s302, %s287, 32, 32, 2
        $region40: #{tpu_custom_call.1} parent=27 // pred_fallthru
          _
      $region28: #{tpu_custom_call.1} parent=5 // pred_fallthru
        _
      %p310 = scmp.le.s32.totalorder 2, %s15
      // Predicated region
      $region41: #{tpu_custom_call.1} parent=5 // pred_check
        %p311 = pneg %p310
      $region42: #{tpu_custom_call.1} parent=5 // pred_check_branch
        %313 = sbr.rel (%p311) target = $region44
      $region43: #{tpu_custom_call.1} parent=5 // pred_region
        %s314 = ssub.s32 %s15, 2
        // Predicated region
        $region45: #{tpu_custom_call.1} parent=43 // pred_check
          %p315 = pneg %p118
        $region46: #{tpu_custom_call.1} parent=43 // pred_check_branch
          %317 = sbr.rel (%p315) target = $region48
        $region47: #{tpu_custom_call.1} parent=43 // pred_region
          %s318 = sand.u32 %s103, 1
          %s319 = scalar_lea.sflag [#allocation4], %s318
          %s320 = sand.u32 %s103, 1
          %s321 = smul.addr %s320, 8
          %s322 = scalar_lea.vmem [#allocation7], %s321
          %323 = dma.done %s319, 128
        $region48: #{tpu_custom_call.1} parent=43 // pred_fallthru
          _
      $region44: #{tpu_custom_call.1} parent=5 // pred_fallthru
        _
    $region6: #{tpu_custom_call.1} parent=1 // loop_footer
      %s19 = sadd.s32 1, %s15
    $region7: #{tpu_custom_call.1} parent=1 // loop_footer_branch
      %14 = sbr.rel target = $region3
    $region8: #{tpu_custom_call.1} parent=1 // loop_exit
      _
    %324 = vsyncpa [#allocation3], 1
    %s325 = scalar_lea.sflag [#allocation3], 1
    %326 = vsyncpa %s325, 1
    %327 = vsyncpa [#allocation4], 1
    %s328 = scalar_lea.sflag [#allocation4], 1
    %329 = vsyncpa %s328, 1
    %330 = vsyncpa [#allocation5], 1
    %s331 = scalar_lea.sflag [#allocation5], 1
    %332 = vsyncpa %s331, 1

</llo_original>
